<compile_context>
chip_gen: v5e
topology: v5e:2x2
jax: 0.10.0
libtpu: 0.0.40
codegen_flags: <defaults>
</compile_context>

<pallas_src>
import functools

import jax
import jax.numpy as jnp
from jax.experimental import pallas as pl
from jax.experimental.pallas import tpu as pltpu


OUT_LANES = 128  # packed output slab width (lane-dense multiple of 128)


def _round_up(x, m):
    return ((x + m - 1) // m) * m


def vae_kernel(x_ref, eps_ref,
               w1e_ref, b1e_ref, wml_ref, bml_ref,
               w1d_ref, b1d_ref, w2d_ref, b2d_ref,
               out_ref, *, latent_dim, input_dim):
    x = x_ref[...]                                      # (tb, input_dim) f32

    # ---- Encoder: fc1 + relu (bf16 MXU operands, f32 accumulate/elementwise)
    h = jnp.dot(x.astype(jnp.bfloat16), w1e_ref[...],
                preferred_element_type=jnp.float32) + b1e_ref[...]
    h = jnp.maximum(h, 0.0)

    # ---- Fused mean|logvar projection: one (tb, 2*latent) matmul, then split.
    ml = jnp.dot(h.astype(jnp.bfloat16), wml_ref[...],
                 preferred_element_type=jnp.float32) + bml_ref[...]
    mean = ml[:, :latent_dim]
    logvar = ml[:, latent_dim:]

    # ---- Reparameterize (f32 elementwise; exp on EUP).
    z = mean + eps_ref[...] * jnp.exp(0.5 * logvar)

    # ---- Decoder: fc1 + relu, fc2 + sigmoid.
    hd = jnp.dot(z.astype(jnp.bfloat16), w1d_ref[...],
                 preferred_element_type=jnp.float32) + b1d_ref[...]
    hd = jnp.maximum(hd, 0.0)
    logits = jnp.dot(hd.astype(jnp.bfloat16), w2d_ref[...],
                     preferred_element_type=jnp.float32) + b2d_ref[...]
    recon = jax.nn.sigmoid(logits)

    # ---- Pack all three results into a single lane-dense 128-wide slab.
    tb = out_ref.shape[0]
    used = input_dim + 2 * latent_dim
    out_ref[:, 0:input_dim] = recon
    out_ref[:, input_dim:input_dim + latent_dim] = mean
    out_ref[:, input_dim + latent_dim:used] = logvar
    out_ref[:, used:] = jnp.zeros((tb, OUT_LANES - used), jnp.float32)


def pack_params(p):
    """Fuse wm|wlv into one projection and cast matmul weights to bf16."""
    wml = jnp.concatenate([p["wm"], p["wlv"]], axis=1)
    bml = jnp.concatenate([p["bm"], p["blv"]], axis=1)
    return dict(
        w1e=p["w1e"].astype(jnp.bfloat16), b1e=p["b1e"],
        wml=wml.astype(jnp.bfloat16),      bml=bml,
        w1d=p["w1d"].astype(jnp.bfloat16), b1d=p["b1d"],
        w2d=p["w2d"].astype(jnp.bfloat16), b2d=p["b2d"],
    )


@functools.partial(jax.jit, static_argnames=("tile_b",))
def vae_forward(x, eps, packed, *, tile_b=2048):
    """x: (B, input_dim) f32, eps: (B, latent_dim) f32, packed: pack_params().

    Returns (recon (B, input_dim), mean (B, latent_dim), logvar (B, latent_dim)).
    """
    B, input_dim = x.shape
    latent_dim = eps.shape[1]
    hidden = packed["w1e"].shape[1]
    assert input_dim + 2 * latent_dim <= OUT_LANES, "packed slab too narrow"

    # Batch tile: multiple of 8 (f32 sublane); no batch round-up padding —
    # a ragged last tile is handled by OOB-read / dropped-write semantics.
    tb = min(tile_b, _round_up(B, 8))
    grid = (pl.cdiv(B, tb),)

    weight_keys = ("w1e", "b1e", "wml", "bml", "w1d", "b1d", "w2d", "b2d")
    weights = [packed[k] for k in weight_keys]

    in_specs = [
        pl.BlockSpec((tb, input_dim), lambda i: (i, 0)),    # x tile
        pl.BlockSpec((tb, latent_dim), lambda i: (i, 0)),   # eps tile (unpadded)
    ] + [
        # Constant index_map => weights stay resident in VMEM, DMA'd once.
        pl.BlockSpec(w.shape, lambda i: (0, 0)) for w in weights
    ]

    out_specs = pl.BlockSpec((tb, OUT_LANES), lambda i: (i, 0))
    out_shape = jax.ShapeDtypeStruct((B, OUT_LANES), jnp.float32)

    flops = 2 * B * hidden * (input_dim + 2 * latent_dim + latent_dim + input_dim)
    transcendentals = B * (latent_dim + input_dim)          # exp + sigmoid
    bytes_accessed = (
        x.size * 4 + eps.size * 4
        + sum(int(w.size) * w.dtype.itemsize for w in weights)
        + B * OUT_LANES * 4
    )

    kernel = functools.partial(vae_kernel,
                               latent_dim=latent_dim, input_dim=input_dim)

    out = pl.pallas_call(
        kernel,
        out_shape=out_shape,
        grid=grid,
        in_specs=in_specs,
        out_specs=out_specs,
        compiler_params=pltpu.CompilerParams(
            dimension_semantics=("parallel",)),             # shard batch over TCs
        cost_estimate=pl.CostEstimate(
            flops=flops, transcendentals=transcendentals,
            bytes_accessed=bytes_accessed),
    )(x, eps, *weights)

    # Single unpack of the packed slab (consumers needing the raw slab could
    # take `out` directly and skip these slices entirely).
    recon = out[:, :input_dim]
    mean = out[:, input_dim:input_dim + latent_dim]
    logvar = out[:, input_dim + latent_dim:input_dim + 2 * latent_dim]
    return recon, mean, logvar


def init_params(key, input_dim, latent_dim, hidden=128):
    """Deterministic synthetic parameters (Linear weights stored as (in, out))."""
    ks = jax.random.split(key, 5)

    def lin(k, fan_in, fan_out):
        scale = 1.0 / jnp.sqrt(fan_in)
        w = jax.random.uniform(k, (fan_in, fan_out), jnp.float32, -scale, scale)
        b = jnp.zeros((1, fan_out), jnp.float32)
        return w, b

    w1e, b1e = lin(ks[0], input_dim, hidden)
    wm, bm = lin(ks[1], hidden, latent_dim)
    wlv, blv = lin(ks[2], hidden, latent_dim)
    w1d, b1d = lin(ks[3], latent_dim, hidden)
    w2d, b2d = lin(ks[4], hidden, input_dim)
    return dict(w1e=w1e, b1e=b1e, wm=wm, bm=bm, wlv=wlv, blv=blv,
                w1d=w1d, b1d=b1d, w2d=w2d, b2d=b2d)


def vae_forward_ref(x, eps, p):
    """Pure-JAX f32 reference (matches the PyTorch module's forward)."""
    h = jnp.maximum(x @ p["w1e"] + p["b1e"], 0.0)
    mean = h @ p["wm"] + p["bm"]
    logvar = h @ p["wlv"] + p["blv"]
    z = mean + eps * jnp.exp(0.5 * logvar)
    hd = jnp.maximum(z @ p["w1d"] + p["b1d"], 0.0)
    recon = jax.nn.sigmoid(hd @ p["w2d"] + p["b2d"])
    return recon, mean, logvar


if __name__ == "__main__":
    B, input_dim, latent_dim = 8, 32, 8

    key = jax.random.PRNGKey(0)
    k_x, k_eps, k_p = jax.random.split(key, 3)

    x = jax.random.normal(k_x, (B, input_dim), jnp.float32)
    # TODO(synk): torch.randn_like noise is sampled host-side and passed in
    # (deterministic); an in-kernel pltpu.prng_* variant is possible if needed.
    eps = jax.random.normal(k_eps, (B, latent_dim), jnp.float32)
    params = init_params(k_p, input_dim, latent_dim)
    packed = pack_params(params)

    recon, mean, logvar = jax.block_until_ready(vae_forward(x, eps, packed))

    # Reference is full f32; kernel uses bf16 MXU operands with f32
    # accumulation, so compare with a bf16-level tolerance.
    r_ref, m_ref, lv_ref = vae_forward_ref(x, eps, params)
    assert jnp.allclose(recon, r_ref, atol=2e-2, rtol=2e-2), "recon mismatch"
    assert jnp.allclose(mean, m_ref, atol=2e-2, rtol=2e-2), "mean mismatch"
    assert jnp.allclose(logvar, lv_ref, atol=2e-2, rtol=2e-2), "logvar mismatch"

    print("KERNEL_OK")
</pallas_src>

<mosaic_0001>
module attributes {stable_mosaic.version = 11 : i64} {
  func.func @vae_kernel(%arg0: i32, %arg1: memref<8x32xf32, #tpu.memory_space<vmem>>, %arg2: memref<8x8xf32, #tpu.memory_space<vmem>>, %arg3: memref<32x128xbf16, #tpu.memory_space<vmem>>, %arg4: memref<1x128xf32, #tpu.memory_space<vmem>>, %arg5: memref<128x16xbf16, #tpu.memory_space<vmem>>, %arg6: memref<1x16xf32, #tpu.memory_space<vmem>>, %arg7: memref<8x128xbf16, #tpu.memory_space<vmem>>, %arg8: memref<1x128xf32, #tpu.memory_space<vmem>>, %arg9: memref<128x32xbf16, #tpu.memory_space<vmem>>, %arg10: memref<1x32xf32, #tpu.memory_space<vmem>>, %arg11: memref<8x128xf32, #tpu.memory_space<vmem>>) attributes {dimension_semantics = [#tpu.dimension_semantics<parallel>], iteration_bounds = array<i64: 1>, scalar_prefetch = 0 : i64, scratch_operands = 0 : i64, tpu.core_type = #tpu.core_type<tc>, window_params = [{transform_indices = @transform_0, window_bounds = array<i64: 8, 32>}, {transform_indices = @transform_1, window_bounds = array<i64: 8, 8>}, {pipeline_mode = #tpu.pipeline_mode<synchronous>, transform_indices = @transform_2, window_bounds = array<i64: 32, 128>}, {pipeline_mode = #tpu.pipeline_mode<synchronous>, transform_indices = @transform_3, window_bounds = array<i64: 1, 128>}, {pipeline_mode = #tpu.pipeline_mode<synchronous>, transform_indices = @transform_4, window_bounds = array<i64: 128, 16>}, {pipeline_mode = #tpu.pipeline_mode<synchronous>, transform_indices = @transform_5, window_bounds = array<i64: 1, 16>}, {pipeline_mode = #tpu.pipeline_mode<synchronous>, transform_indices = @transform_6, window_bounds = array<i64: 8, 128>}, {pipeline_mode = #tpu.pipeline_mode<synchronous>, transform_indices = @transform_7, window_bounds = array<i64: 1, 128>}, {pipeline_mode = #tpu.pipeline_mode<synchronous>, transform_indices = @transform_8, window_bounds = array<i64: 128, 32>}, {pipeline_mode = #tpu.pipeline_mode<synchronous>, transform_indices = @transform_9, window_bounds = array<i64: 1, 32>}, {transform_indices = @transform_10, window_bounds = array<i64: 8, 128>}]} {
    %c0 = arith.constant 0 : index
    %c0_0 = arith.constant 0 : index
    %0 = vector.load %arg1[%c0, %c0_0] : memref<8x32xf32, #tpu.memory_space<vmem>>, vector<8x32xf32>
    %1 = arith.truncf %0 : vector<8x32xf32> to vector<8x32xbf16>
    %c0_1 = arith.constant 0 : index
    %c0_2 = arith.constant 0 : index
    %2 = vector.load %arg3[%c0_1, %c0_2] : memref<32x128xbf16, #tpu.memory_space<vmem>>, vector<32x128xbf16>
    %cst = arith.constant dense<0.000000e+00> : vector<8x128xf32>
    %3 = tpu.matmul %1, %2, %cst {dimension_numbers = #tpu.dot_dimension_numbers<[1], [0], [0], [1], [0, 0, 1, 1], [], []>} : vector<8x32xbf16>, vector<32x128xbf16>, vector<8x128xf32> -> vector<8x128xf32>
    %c0_3 = arith.constant 0 : index
    %c0_4 = arith.constant 0 : index
    %4 = vector.load %arg4[%c0_3, %c0_4] : memref<1x128xf32, #tpu.memory_space<vmem>>, vector<1x128xf32>
    %5 = vector.broadcast %4 : vector<1x128xf32> to vector<8x128xf32>
    %6 = arith.addf %3, %5 : vector<8x128xf32>
    %cst_5 = arith.constant 0.000000e+00 : f32
    %7 = vector.broadcast %cst_5 : f32 to vector<8x128xf32>
    %8 = arith.maximumf %6, %7 : vector<8x128xf32>
    %9 = arith.truncf %8 : vector<8x128xf32> to vector<8x128xbf16>
    %c0_6 = arith.constant 0 : index
    %c0_7 = arith.constant 0 : index
    %10 = vector.load %arg5[%c0_6, %c0_7] : memref<128x16xbf16, #tpu.memory_space<vmem>>, vector<128x16xbf16>
    %cst_8 = arith.constant dense<0.000000e+00> : vector<8x16xf32>
    %11 = tpu.matmul %9, %10, %cst_8 {dimension_numbers = #tpu.dot_dimension_numbers<[1], [0], [0], [1], [0, 0, 1, 1], [], []>} : vector<8x128xbf16>, vector<128x16xbf16>, vector<8x16xf32> -> vector<8x16xf32>
    %c0_9 = arith.constant 0 : index
    %c0_10 = arith.constant 0 : index
    %12 = vector.load %arg6[%c0_9, %c0_10] : memref<1x16xf32, #tpu.memory_space<vmem>>, vector<1x16xf32>
    %13 = vector.broadcast %12 : vector<1x16xf32> to vector<8x16xf32>
    %14 = arith.addf %11, %13 : vector<8x16xf32>
    %15 = vector.extract_strided_slice %14 {offsets = [0, 0], sizes = [8, 8], strides = [1, 1]} : vector<8x16xf32> to vector<8x8xf32>
    %16 = vector.extract_strided_slice %14 {offsets = [0, 8], sizes = [8, 8], strides = [1, 1]} : vector<8x16xf32> to vector<8x8xf32>
    %c0_11 = arith.constant 0 : index
    %c0_12 = arith.constant 0 : index
    %17 = vector.load %arg2[%c0_11, %c0_12] : memref<8x8xf32, #tpu.memory_space<vmem>>, vector<8x8xf32>
    %cst_13 = arith.constant 5.000000e-01 : f32
    %18 = vector.broadcast %cst_13 : f32 to vector<8x8xf32>
    %19 = arith.mulf %18, %16 : vector<8x8xf32>
    %20 = math.exp %19 : vector<8x8xf32>
    %21 = arith.mulf %17, %20 : vector<8x8xf32>
    %22 = arith.addf %15, %21 : vector<8x8xf32>
    %23 = arith.truncf %22 : vector<8x8xf32> to vector<8x8xbf16>
    %c0_14 = arith.constant 0 : index
    %c0_15 = arith.constant 0 : index
    %24 = vector.load %arg7[%c0_14, %c0_15] : memref<8x128xbf16, #tpu.memory_space<vmem>>, vector<8x128xbf16>
    %cst_16 = arith.constant dense<0.000000e+00> : vector<8x128xf32>
    %25 = tpu.matmul %23, %24, %cst_16 {dimension_numbers = #tpu.dot_dimension_numbers<[1], [0], [0], [1], [0, 0, 1, 1], [], []>} : vector<8x8xbf16>, vector<8x128xbf16>, vector<8x128xf32> -> vector<8x128xf32>
    %c0_17 = arith.constant 0 : index
    %c0_18 = arith.constant 0 : index
    %26 = vector.load %arg8[%c0_17, %c0_18] : memref<1x128xf32, #tpu.memory_space<vmem>>, vector<1x128xf32>
    %27 = vector.broadcast %26 : vector<1x128xf32> to vector<8x128xf32>
    %28 = arith.addf %25, %27 : vector<8x128xf32>
    %cst_19 = arith.constant 0.000000e+00 : f32
    %29 = vector.broadcast %cst_19 : f32 to vector<8x128xf32>
    %30 = arith.maximumf %28, %29 : vector<8x128xf32>
    %31 = arith.truncf %30 : vector<8x128xf32> to vector<8x128xbf16>
    %c0_20 = arith.constant 0 : index
    %c0_21 = arith.constant 0 : index
    %32 = vector.load %arg9[%c0_20, %c0_21] : memref<128x32xbf16, #tpu.memory_space<vmem>>, vector<128x32xbf16>
    %cst_22 = arith.constant dense<0.000000e+00> : vector<8x32xf32>
    %33 = tpu.matmul %31, %32, %cst_22 {dimension_numbers = #tpu.dot_dimension_numbers<[1], [0], [0], [1], [0, 0, 1, 1], [], []>} : vector<8x128xbf16>, vector<128x32xbf16>, vector<8x32xf32> -> vector<8x32xf32>
    %c0_23 = arith.constant 0 : index
    %c0_24 = arith.constant 0 : index
    %34 = vector.load %arg10[%c0_23, %c0_24] : memref<1x32xf32, #tpu.memory_space<vmem>>, vector<1x32xf32>
    %35 = vector.broadcast %34 : vector<1x32xf32> to vector<8x32xf32>
    %36 = arith.addf %33, %35 : vector<8x32xf32>
    %37 = arith.negf %36 : vector<8x32xf32>
    %38 = math.exp %37 : vector<8x32xf32>
    %cst_25 = arith.constant 1.000000e+00 : f32
    %39 = vector.broadcast %cst_25 : f32 to vector<8x32xf32>
    %40 = arith.addf %39, %38 : vector<8x32xf32>
    %41 = arith.divf %39, %40 : vector<8x32xf32>
    %c0_26 = arith.constant 0 : index
    %c0_27 = arith.constant 0 : index
    %42 = vector.load %arg11[%c0_26, %c0_27] : memref<8x128xf32, #tpu.memory_space<vmem>>, vector<8x32xf32>
    tpu.vector_store %arg11[%c0_26, %c0_27], %41 {strides = array<i32>} : memref<8x128xf32, #tpu.memory_space<vmem>>, vector<8x32xf32>,
    %c0_28 = arith.constant 0 : index
    %c32 = arith.constant 32 : index
    %43 = vector.load %arg11[%c0_28, %c32] : memref<8x128xf32, #tpu.memory_space<vmem>>, vector<8x8xf32>
    tpu.vector_store %arg11[%c0_28, %c32], %15 {strides = array<i32>} : memref<8x128xf32, #tpu.memory_space<vmem>>, vector<8x8xf32>,
    %c0_29 = arith.constant 0 : index
    %c40 = arith.constant 40 : index
    %44 = vector.load %arg11[%c0_29, %c40] : memref<8x128xf32, #tpu.memory_space<vmem>>, vector<8x8xf32>
    tpu.vector_store %arg11[%c0_29, %c40], %16 {strides = array<i32>} : memref<8x128xf32, #tpu.memory_space<vmem>>, vector<8x8xf32>,
    %cst_30 = arith.constant 0.000000e+00 : f32
    %45 = vector.broadcast %cst_30 : f32 to vector<8x80xf32>
    %c0_31 = arith.constant 0 : index
    %c48 = arith.constant 48 : index
    %46 = vector.load %arg11[%c0_31, %c48] : memref<8x128xf32, #tpu.memory_space<vmem>>, vector<8x80xf32>
    tpu.vector_store %arg11[%c0_31, %c48], %45 {strides = array<i32>} : memref<8x128xf32, #tpu.memory_space<vmem>>, vector<8x80xf32>,
    return
  }
  func.func @transform_0(%arg0: i32) -> (i32, i32) {
    %c0_i32 = arith.constant 0 : i32
    %c0_i32_0 = arith.constant 0 : i32
    return %arg0, %c0_i32 : i32, i32
  }
  func.func @transform_1(%arg0: i32) -> (i32, i32) {
    %c0_i32 = arith.constant 0 : i32
    %c0_i32_0 = arith.constant 0 : i32
    return %arg0, %c0_i32 : i32, i32
  }
  func.func @transform_2(%arg0: i32) -> (i32, i32) {
    %c0_i32 = arith.constant 0 : i32
    %c0_i32_0 = arith.constant 0 : i32
    %c0_i32_1 = arith.constant 0 : i32
    return %c0_i32, %c0_i32_0 : i32, i32
  }
  func.func @transform_3(%arg0: i32) -> (i32, i32) {
    %c0_i32 = arith.constant 0 : i32
    %c0_i32_0 = arith.constant 0 : i32
    %c0_i32_1 = arith.constant 0 : i32
    return %c0_i32, %c0_i32_0 : i32, i32
  }
  func.func @transform_4(%arg0: i32) -> (i32, i32) {
    %c0_i32 = arith.constant 0 : i32
    %c0_i32_0 = arith.constant 0 : i32
    %c0_i32_1 = arith.constant 0 : i32
    return %c0_i32, %c0_i32_0 : i32, i32
  }
  func.func @transform_5(%arg0: i32) -> (i32, i32) {
    %c0_i32 = arith.constant 0 : i32
    %c0_i32_0 = arith.constant 0 : i32
    %c0_i32_1 = arith.constant 0 : i32
    return %c0_i32, %c0_i32_0 : i32, i32
  }
  func.func @transform_6(%arg0: i32) -> (i32, i32) {
    %c0_i32 = arith.constant 0 : i32
    %c0_i32_0 = arith.constant 0 : i32
    %c0_i32_1 = arith.constant 0 : i32
    return %c0_i32, %c0_i32_0 : i32, i32
  }
  func.func @transform_7(%arg0: i32) -> (i32, i32) {
    %c0_i32 = arith.constant 0 : i32
    %c0_i32_0 = arith.constant 0 : i32
    %c0_i32_1 = arith.constant 0 : i32
    return %c0_i32, %c0_i32_0 : i32, i32
  }
  func.func @transform_8(%arg0: i32) -> (i32, i32) {
    %c0_i32 = arith.constant 0 : i32
    %c0_i32_0 = arith.constant 0 : i32
    %c0_i32_1 = arith.constant 0 : i32
    return %c0_i32, %c0_i32_0 : i32, i32
  }
  func.func @transform_9(%arg0: i32) -> (i32, i32) {
    %c0_i32 = arith.constant 0 : i32
    %c0_i32_0 = arith.constant 0 : i32
    %c0_i32_1 = arith.constant 0 : i32
    return %c0_i32, %c0_i32_0 : i32, i32
  }
  func.func @transform_10(%arg0: i32) -> (i32, i32) {
    %c0_i32 = arith.constant 0 : i32
    %c0_i32_0 = arith.constant 0 : i32
    return %arg0, %c0_i32 : i32, i32
  }
}

</mosaic_0001>

<llo_original>
// kernel: vae_forward.1
$region0: #{vae_forward.1}
  #allocation0 [shape = 'u32[]', space=smem, size = 0x4, offset = 0x4, fixed_abs, tag = 'smem constant byte address 0x4 - core index']
  #allocation1 [shape = 'u32[72,128]{1,0:T(1,128)}', space=vmem, size = 0x9000, scoped, tag = 'internal scratch']
  %s0 = inlined_call_operand.vmem [shape: f32[8,32], index: 0, kind: input, shape index: {}]
  %s1 = inlined_call_operand.vmem [shape: f32[8,8], index: 1, kind: input, shape index: {}]
  %s2 = inlined_call_operand.vmem [shape: bf16[32,128], index: 2, kind: input, shape index: {}]
  %s3 = inlined_call_operand.vmem [shape: f32[1,128], index: 3, kind: input, shape index: {}]
  %s4 = inlined_call_operand.vmem [shape: bf16[128,16], index: 4, kind: input, shape index: {}]
  %s5 = inlined_call_operand.vmem [shape: f32[1,16], index: 5, kind: input, shape index: {}]
  %s6 = inlined_call_operand.vmem [shape: bf16[8,128], index: 6, kind: input, shape index: {}]
  %s7 = inlined_call_operand.vmem [shape: f32[1,128], index: 7, kind: input, shape index: {}]
  %s8 = inlined_call_operand.vmem [shape: bf16[128,32], index: 8, kind: input, shape index: {}]
  %s9 = inlined_call_operand.vmem [shape: f32[1,32], index: 9, kind: input, shape index: {}]
  %s10 = inlined_call_operand.vmem [shape: f32[8,128], index: 10, kind: output, shape index: {}]
  %s11 = sld [smem:[#allocation0]]
  $region50: #{vae_forward.1} parent=0
    _
  %s13 = ssub.s32 1, %s11
  %s14 = scalar_select 0, %s13, %s11
  // Predicated region
  $region2: #{vae_forward.1} parent=0 // pred_check
    _
  $region3: #{vae_forward.1} parent=0 // pred_check_branch
    %16 = sbr.rel (0) target = $region5
  $region4: #{vae_forward.1} parent=0 // pred_region
    _
  $region5: #{vae_forward.1} parent=0 // pred_fallthru
    _
  // Predicated region
  $region6: #{vae_forward.1} parent=0 // pred_check
    _
  $region7: #{vae_forward.1} parent=0 // pred_check_branch
    %18 = sbr.rel (0) target = $region9
  $region8: #{vae_forward.1} parent=0 // pred_region
    _
  $region9: #{vae_forward.1} parent=0 // pred_fallthru
    _
  // Predicated region
  $region10: #{vae_forward.1} parent=0 // pred_check
    _
  $region11: #{vae_forward.1} parent=0 // pred_check_branch
    %20 = sbr.rel (0) target = $region13
  $region12: #{vae_forward.1} parent=0 // pred_region
    _
  $region13: #{vae_forward.1} parent=0 // pred_fallthru
    _
  // Predicated region
  $region14: #{vae_forward.1} parent=0 // pred_check
    _
  $region15: #{vae_forward.1} parent=0 // pred_check_branch
    %22 = sbr.rel (0) target = $region17
  $region16: #{vae_forward.1} parent=0 // pred_region
    _
  $region17: #{vae_forward.1} parent=0 // pred_fallthru
    _
  // Predicated region
  $region18: #{vae_forward.1} parent=0 // pred_check
    _
  $region19: #{vae_forward.1} parent=0 // pred_check_branch
    %24 = sbr.rel (0) target = $region21
  $region20: #{vae_forward.1} parent=0 // pred_region
    _
  $region21: #{vae_forward.1} parent=0 // pred_fallthru
    _
  // Predicated region
  $region22: #{vae_forward.1} parent=0 // pred_check
    _
  $region23: #{vae_forward.1} parent=0 // pred_check_branch
    %26 = sbr.rel (0) target = $region25
  $region24: #{vae_forward.1} parent=0 // pred_region
    _
  $region25: #{vae_forward.1} parent=0 // pred_fallthru
    _
  // Predicated region
  $region26: #{vae_forward.1} parent=0 // pred_check
    _
  $region27: #{vae_forward.1} parent=0 // pred_check_branch
    %28 = sbr.rel (0) target = $region29
  $region28: #{vae_forward.1} parent=0 // pred_region
    _
  $region29: #{vae_forward.1} parent=0 // pred_fallthru
    _
  // Predicated region
  $region30: #{vae_forward.1} parent=0 // pred_check
    _
  $region31: #{vae_forward.1} parent=0 // pred_check_branch
    %30 = sbr.rel (0) target = $region33
  $region32: #{vae_forward.1} parent=0 // pred_region
    _
  $region33: #{vae_forward.1} parent=0 // pred_fallthru
    _
  // Predicated region
  $region34: #{vae_forward.1} parent=0 // pred_check
    _
  $region35: #{vae_forward.1} parent=0 // pred_check_branch
    %32 = sbr.rel (0) target = $region37
  $region36: #{vae_forward.1} parent=0 // pred_region
    _
  $region37: #{vae_forward.1} parent=0 // pred_fallthru
    _
  // Predicated region
  $region38: #{vae_forward.1} parent=0 // pred_check
    _
  $region39: #{vae_forward.1} parent=0 // pred_check_branch
    %34 = sbr.rel (0) target = $region41
  $region40: #{vae_forward.1} parent=0 // pred_region
    _
  $region41: #{vae_forward.1} parent=0 // pred_fallthru
    _
  %v36 = vld [vmem:[%s0] sm:$0xff]
  %v37 = vpack.c.bf16 %v36, %v36
  %v38 = vld [vmem:[%s2] sm:$0xf]
  %v39 = vld [vmem:[%s2 + $0x4] sm:$0xf]
  %v40 = vld [vmem:[%s2 + $0x8] sm:$0xf]
  %v41 = vld [vmem:[%s2 + $0xc] sm:$0xf]
  %v42 = vld [vmem:[%s3] sm:$0x1]
  %v44 = vperm.slane %v42, 0
  %v50 = vunpack.c.l.b16 %v38
  %v51 = vunpack.c.l.b16 %v39
  %v52 = vunpack.c.l.b16 %v40
  %v53 = vunpack.c.l.b16 %v41
  %v54 = vpack.c.b16 %v51, %v50
  %v55 = vpack.c.b16 %v53, %v52
  %vm58 = vcmask 261120
  %v60 = vsel %vm58, %v37, 0
  %62 = vmatpush.bf16.msra.mxu0 0
  %63 = vmatpush.bf16.msra.mxu0 0
  %64 = vmatpush.bf16.msra.mxu0 0
  %65 = vmatpush.bf16.msra.mxu0 0
  %66 = vmatpush.bf16.msra.mxu0 0
  %67 = vmatpush.bf16.msra.mxu0 0
  %68 = vmatpush.bf16.msra.mxu0 %v55
  %69 = vmatpush.bf16.msra.mxu0 %v54
  %70 = vmatmul.bf16.gmra.mxu0 %v60
  %v71 = vpop.f32.mrf.mxu0
  %v72 = vadd.f32 %v44, %v71
  %v73 = vpop.f32.mrf.mxu0
  %74 = vdwg.mxu0
  %v75 = vmax.f32 %v72, 0.0
  %v76 = vpack.c.bf16 %v75, %v75
  %v77 = vld [vmem:[%s4] sm:$0xf]
  %v78 = vld [vmem:[%s4 + $0x4] sm:$0xf]
  %v79 = vld [vmem:[%s4 + $0x8] sm:$0xf]
  %v80 = vld [vmem:[%s4 + $0xc] sm:$0xf]
  %v81 = vld [vmem:[%s4 + $0x10] sm:$0xf]
  %v82 = vld [vmem:[%s4 + $0x14] sm:$0xf]
  %v83 = vld [vmem:[%s4 + $0x18] sm:$0xf]
  %v84 = vld [vmem:[%s4 + $0x1c] sm:$0xf]
  %v85 = vld [vmem:[%s4 + $0x20] sm:$0xf]
  %v86 = vld [vmem:[%s4 + $0x24] sm:$0xf]
  %v87 = vld [vmem:[%s4 + $0x28] sm:$0xf]
  %v88 = vld [vmem:[%s4 + $0x2c] sm:$0xf]
  %v89 = vld [vmem:[%s4 + $0x30] sm:$0xf]
  %v90 = vld [vmem:[%s4 + $0x34] sm:$0xf]
  %v91 = vld [vmem:[%s4 + $0x38] sm:$0xf]
  %v92 = vld [vmem:[%s4 + $0x3c] sm:$0xf]
  %v93 = vld [vmem:[%s5] sm:$0x1]
  %v95 = vperm.slane %v93, 0
  %v113 = vunpack.c.l.b16 %v77
  %v114 = vunpack.c.l.b16 %v78
  %v115 = vunpack.c.l.b16 %v79
  %v116 = vunpack.c.l.b16 %v80
  %v117 = vunpack.c.l.b16 %v81
  %v118 = vunpack.c.l.b16 %v82
  %v119 = vunpack.c.l.b16 %v83
  %v120 = vunpack.c.l.b16 %v84
  %v121 = vunpack.c.l.b16 %v85
  %v122 = vunpack.c.l.b16 %v86
  %v123 = vunpack.c.l.b16 %v87
  %v124 = vunpack.c.l.b16 %v88
  %v125 = vunpack.c.l.b16 %v89
  %v126 = vunpack.c.l.b16 %v90
  %v127 = vunpack.c.l.b16 %v91
  %v128 = vunpack.c.l.b16 %v92
  %v129 = vpack.c.b16 %v114, %v113
  %v130 = vpack.c.b16 %v116, %v115
  %v131 = vpack.c.b16 %v118, %v117
  %v132 = vpack.c.b16 %v120, %v119
  %v133 = vpack.c.b16 %v122, %v121
  %v134 = vpack.c.b16 %v124, %v123
  %v135 = vpack.c.b16 %v126, %v125
  %v136 = vpack.c.b16 %v128, %v127
  %145 = vmatpush.bf16.msra.mxu0 %v136
  %146 = vmatpush.bf16.msra.mxu0 %v135
  %147 = vmatpush.bf16.msra.mxu0 %v134
  %148 = vmatpush.bf16.msra.mxu0 %v133
  %149 = vmatpush.bf16.msra.mxu0 %v132
  %150 = vmatpush.bf16.msra.mxu0 %v131
  %151 = vmatpush.bf16.msra.mxu0 %v130
  %152 = vmatpush.bf16.msra.mxu0 %v129
  %153 = vmatmul.bf16.gmra.mxu0 %v76
  %v154 = vpop.f32.mrf.mxu0
  %v155 = vadd.f32 %v95, %v154
  %v156 = vpop.f32.mrf.mxu0
  %157 = vdwg.mxu0
  %v158 = vld [vmem:[%s1] sm:$0xff]
  %v159 = vmul.f32 %v155, 0.5
  %v160 = vmul.f32 %v159, 1.442695
  %v161 = vpow.pop %v160
  %163 = vrot.lane.b32.xlu0 %v161, 120
  %v164 = vpop.permute.xlu0 %163
  %v166 = vmul.f32 %v158, %v164
  %v167 = vadd.f32 %v155, %v166
  %v168 = vpack.c.bf16 %v167, %v167
  %v169 = vld [vmem:[%s6] sm:$0xf]
  %v170 = vld [vmem:[%s7] sm:$0x1]
  %v172 = vperm.slane %v170, 0
  %vm174 = vcmask 64512
  %v176 = vsel %vm174, %v168, 0
  %vm178 = vcmask 1043456
  %v180 = vsel %vm178, %v169, 0
  %182 = vmatpush.bf16.msra.mxu0 0
  %183 = vmatpush.bf16.msra.mxu0 0
  %184 = vmatpush.bf16.msra.mxu0 0
  %185 = vmatpush.bf16.msra.mxu0 0
  %186 = vmatpush.bf16.msra.mxu0 0
  %187 = vmatpush.bf16.msra.mxu0 0
  %188 = vmatpush.bf16.msra.mxu0 0
  %189 = vmatpush.bf16.msra.mxu0 %v180
  %190 = vmatmul.bf16.gmra.mxu0 %v176
  %v191 = vpop.f32.mrf.mxu0
  %v192 = vadd.f32 %v172, %v191
  %v193 = vpop.f32.mrf.mxu0
  %194 = vdwg.mxu0
  %v195 = vmax.f32 %v192, 0.0
  %v196 = vpack.c.bf16 %v195, %v195
  %v197 = vld [vmem:[%s8] sm:$0xf]
  %v198 = vld [vmem:[%s8 + $0x4] sm:$0xf]
  %v199 = vld [vmem:[%s8 + $0x8] sm:$0xf]
  %v200 = vld [vmem:[%s8 + $0xc] sm:$0xf]
  %v201 = vld [vmem:[%s8 + $0x10] sm:$0xf]
  %v202 = vld [vmem:[%s8 + $0x14] sm:$0xf]
  %v203 = vld [vmem:[%s8 + $0x18] sm:$0xf]
  %v204 = vld [vmem:[%s8 + $0x1c] sm:$0xf]
  %v205 = vld [vmem:[%s8 + $0x20] sm:$0xf]
  %v206 = vld [vmem:[%s8 + $0x24] sm:$0xf]
  %v207 = vld [vmem:[%s8 + $0x28] sm:$0xf]
  %v208 = vld [vmem:[%s8 + $0x2c] sm:$0xf]
  %v209 = vld [vmem:[%s8 + $0x30] sm:$0xf]
  %v210 = vld [vmem:[%s8 + $0x34] sm:$0xf]
  %v211 = vld [vmem:[%s8 + $0x38] sm:$0xf]
  %v212 = vld [vmem:[%s8 + $0x3c] sm:$0xf]
  %v213 = vld [vmem:[%s9] sm:$0x1]
  %v215 = vperm.slane %v213, 0
  %v233 = vunpack.c.l.b16 %v197
  %v234 = vunpack.c.l.b16 %v198
  %v235 = vunpack.c.l.b16 %v199
  %v236 = vunpack.c.l.b16 %v200
  %v237 = vunpack.c.l.b16 %v201
  %v238 = vunpack.c.l.b16 %v202
  %v239 = vunpack.c.l.b16 %v203
  %v240 = vunpack.c.l.b16 %v204
  %v241 = vunpack.c.l.b16 %v205
  %v242 = vunpack.c.l.b16 %v206
  %v243 = vunpack.c.l.b16 %v207
  %v244 = vunpack.c.l.b16 %v208
  %v245 = vunpack.c.l.b16 %v209
  %v246 = vunpack.c.l.b16 %v210
  %v247 = vunpack.c.l.b16 %v211
  %v248 = vunpack.c.l.b16 %v212
  %v249 = vpack.c.b16 %v234, %v233
  %v250 = vpack.c.b16 %v236, %v235
  %v251 = vpack.c.b16 %v238, %v237
  %v252 = vpack.c.b16 %v240, %v239
  %v253 = vpack.c.b16 %v242, %v241
  %v254 = vpack.c.b16 %v244, %v243
  %v255 = vpack.c.b16 %v246, %v245
  %v256 = vpack.c.b16 %v248, %v247
  %265 = vmatpush.bf16.msra.mxu0 %v256
  %266 = vmatpush.bf16.msra.mxu0 %v255
  %267 = vmatpush.bf16.msra.mxu0 %v254
  %268 = vmatpush.bf16.msra.mxu0 %v253
  %269 = vmatpush.bf16.msra.mxu0 %v252
  %270 = vmatpush.bf16.msra.mxu0 %v251
  %271 = vmatpush.bf16.msra.mxu0 %v250
  %272 = vmatpush.bf16.msra.mxu0 %v249
  %273 = vmatmul.bf16.gmra.mxu0 %v196
  %v274 = vpop.f32.mrf.mxu0
  %v275 = vadd.f32 %v215, %v274
  %v276 = vpop.f32.mrf.mxu0
  %277 = vdwg.mxu0
  %v278 = vxor.u32 %v275, 2147483648
  %v279 = vmul.f32 %v278, 1.442695
  %v280 = vpow.pop %v279
  %v281 = vadd.f32 %v280, 1.0
  %v282 = vrcp.pop %v281
  %v283 = vmul.f32 %v281, %v282
  %v284 = vsub.f32 1.0, %v283
  %v285 = vmul.f32 %v282, %v284
  %v286 = vadd.f32 %v282, %v285
  %vm287 = vweird.f32 %v281
  %vm288 = vweird.f32 %v282
  %vm289 = vmor %vm287, %vm288
  %v290 = vsel %vm289, %v282, %v286
  %v291 = vand.u32 2147483647, %v281
  %vm292 = vcmp.eq.f32.partialorder %v291, 8.507059e+37
  %v293 = vand.u32 %v281, 2147483648
  %v294 = vor.u32 1.1754944e-38, %v293
  %v295 = vsel %vm292, %v294, %v290
  %v296 = vmul.f32 1.0, %v295
  %297 = vst.msk [vmem:[%s10] sm:$0xff] %vm58, %v296
  %299 = vrot.lane.b32.xlu0 %v155, 32
  %v300 = vpop.permute.xlu0 %299
  %vm302 = vcmask 326912
  %303 = vst.msk [vmem:[%s10] sm:$0xff] %vm302, %v300
  %vm304 = vcmask 392512
  %305 = vst.msk [vmem:[%s10] sm:$0xff] %vm304, %v300
  %vm306 = vcmask 1047936
  %307 = vst.msk [vmem:[%s10] sm:$0xff] %vm306, 0.0
  // Predicated region
  $region42: #{vae_forward.1} parent=0 // pred_check
    _
  $region43: #{vae_forward.1} parent=0 // pred_check_branch
    %309 = sbr.rel (0) target = $region45
  $region44: #{vae_forward.1} parent=0 // pred_region
    _
  $region45: #{vae_forward.1} parent=0 // pred_fallthru
    _
  // Predicated region
  $region46: #{vae_forward.1} parent=0 // pred_check
    _
  $region47: #{vae_forward.1} parent=0 // pred_check_branch
    %311 = sbr.rel (0) target = $region49
  $region48: #{vae_forward.1} parent=0 // pred_region
    _
  $region49: #{vae_forward.1} parent=0 // pred_fallthru
    _

</llo_original>
